<compile_context>
chip_gen: v5e
topology: v5e:2x2
jax: 0.10.0
libtpu: 0.0.40
codegen_flags: <defaults>
</compile_context>

<pallas_src>
import math

import jax
import jax.numpy as jnp
from jax.experimental import pallas as pl
from jax.experimental.pallas import tpu as pltpu

W1 = 512    # hidden width ("w1" in the PyTorch file); already a multiple of 128
LANE = 128  # TPU lane width: last dim of every VMEM tile is padded to a multiple of this


def _round_up(x, m):
    return ((x + m - 1) // m) * m


def _nn1_kernel(x_ref, w1_ref, b1_ref, w2_ref, b2_ref, w3_ref, b3_ref,
                w4_ref, b4_ref, out_ref):
    """One (TILE_B, D_pad) batch tile through the full 4-layer MLP, entirely in VMEM/vregs."""
    mxu_dt = w1_ref.dtype  # bf16 matmul operands, f32 accumulation

    h = jnp.dot(x_ref[...].astype(mxu_dt), w1_ref[...],
                preferred_element_type=jnp.float32) + b1_ref[...]
    h = jnp.maximum(h, 0.0)

    h = jnp.dot(h.astype(mxu_dt), w2_ref[...],
                preferred_element_type=jnp.float32) + b2_ref[...]
    h = jnp.maximum(h, 0.0)

    h = jnp.dot(h.astype(mxu_dt), w3_ref[...],
                preferred_element_type=jnp.float32) + b3_ref[...]
    h = jnp.maximum(h, 0.0)

    out_ref[...] = (jnp.dot(h.astype(mxu_dt), w4_ref[...],
                            preferred_element_type=jnp.float32)
                    + b4_ref[...]).astype(out_ref.dtype)


def make_params(key, input_dim, bottle_dim, *, weight_dtype=jnp.bfloat16):
    """PyTorch nn.Linear-style init: U(-1/sqrt(fan_in), 1/sqrt(fan_in)).

    Weights are stored (fan_in, fan_out) and cast to `weight_dtype` (bf16 by default to
    halve the weight DMA); biases stay f32.
    """
    dims = [(input_dim, W1), (W1, bottle_dim), (bottle_dim, W1), (W1, input_dim)]
    params = {}
    keys = jax.random.split(key, 2 * len(dims))
    for i, (fan_in, fan_out) in enumerate(dims):
        bound = 1.0 / math.sqrt(fan_in)
        w = jax.random.uniform(keys[2 * i], (fan_in, fan_out), jnp.float32, -bound, bound)
        b = jax.random.uniform(keys[2 * i + 1], (1, fan_out), jnp.float32, -bound, bound)
        params[f"w{i + 1}"] = w.astype(weight_dtype)
        params[f"b{i + 1}"] = b
    return params


def neural_network1(x, params, *, input_dim, bottle_dim, tile_b=256):
    """Forward pass of NeuralNetwork1; returns (y, zeros(1)) like the PyTorch module.

    x: (..., input_dim). Leading dims are flattened into the batch and tiled over a 1-D grid.
    tile_b: batch tile (the M of every matmul). 256 is MXU-friendly on v6e/v7x; 128 on v5e.
    """
    if x.shape[-1] != input_dim:
        raise ValueError(f"last dim {x.shape[-1]} != input_dim {input_dim}")
    lead = x.shape[:-1]
    batch = int(math.prod(lead)) if lead else 1
    x2d = x.reshape(batch, input_dim).astype(jnp.float32)

    # Lane-dense padding: every dim that can land on the lane axis of a VMEM tile is padded
    # to a multiple of 128 (exact: padded weights/biases are 0, ReLU(0)=0, slices drop pads).
    d_pad = _round_up(max(input_dim, LANE), LANE)
    bd_pad = _round_up(max(bottle_dim, LANE), LANE)

    # Pad the batch so every tile has a full, sublane-aligned M (>= 8 rows).
    tb = min(tile_b, _round_up(batch, 8))
    b_pad = _round_up(batch, tb)

    x2d = jnp.pad(x2d, ((0, b_pad - batch), (0, d_pad - input_dim)))

    # Cheap one-off pads (could be hoisted/cached by the caller if params are static).
    w1p = jnp.pad(params["w1"], ((0, d_pad - input_dim), (0, 0)))     # (d_pad, 512)
    b1p = params["b1"]                                                # (1, 512)
    w2p = jnp.pad(params["w2"], ((0, 0), (0, bd_pad - bottle_dim)))   # (512, bd_pad)
    b2p = jnp.pad(params["b2"], ((0, 0), (0, bd_pad - bottle_dim)))   # (1, bd_pad)
    w3p = jnp.pad(params["w3"], ((0, bd_pad - bottle_dim), (0, 0)))   # (bd_pad, 512)
    b3p = params["b3"]                                                # (1, 512)
    w4p = jnp.pad(params["w4"], ((0, 0), (0, d_pad - input_dim)))     # (512, d_pad)
    b4p = jnp.pad(params["b4"], ((0, 0), (0, d_pad - input_dim)))     # (1, d_pad)

    batch_spec = lambda i: (i, 0)   # noqa: E731 - x / out walk the batch tiles
    pinned = lambda i: (0, 0)       # noqa: E731 - weights/biases stay VMEM-resident

    out2d = pl.pallas_call(
        _nn1_kernel,
        out_shape=jax.ShapeDtypeStruct((b_pad, d_pad), jnp.float32),
        grid_spec=pltpu.PrefetchScalarGridSpec(
            num_scalar_prefetch=0,
            grid=(b_pad // tb,),
            in_specs=[
                pl.BlockSpec((tb, d_pad), batch_spec),
                pl.BlockSpec((d_pad, W1), pinned),
                pl.BlockSpec((1, W1), pinned),
                pl.BlockSpec((W1, bd_pad), pinned),
                pl.BlockSpec((1, bd_pad), pinned),
                pl.BlockSpec((bd_pad, W1), pinned),
                pl.BlockSpec((1, W1), pinned),
                pl.BlockSpec((W1, d_pad), pinned),
                pl.BlockSpec((1, d_pad), pinned),
            ],
            out_specs=pl.BlockSpec((tb, d_pad), batch_spec),
        ),
        compiler_params=pltpu.CompilerParams(
            dimension_semantics=("parallel",),  # v7x: both TensorCores split the batch tiles
        ),
    )(x2d, w1p, b1p, w2p, b2p, w3p, b3p, w4p, b4p)

    y = out2d[:batch, :input_dim].reshape(*lead, input_dim)
    # The PyTorch forward returns (y, torch.zeros(1)).
    return y, jnp.zeros((1,), jnp.float32)


def _reference(x, params, *, input_dim):
    """Pure-JAX reference (same bf16 weights / f32 accumulation) for validation."""
    lead = x.shape[:-1]
    h = x.reshape(-1, input_dim).astype(jnp.float32)
    for i in range(1, 5):
        w = params[f"w{i}"]
        h = jnp.dot(h.astype(w.dtype), w,
                    preferred_element_type=jnp.float32) + params[f"b{i}"]
        if i < 4:
            h = jnp.maximum(h, 0.0)
    return h.reshape(*lead, input_dim)


if __name__ == "__main__":
    input_dim, bottle_dim = 32, 8

    key = jax.random.PRNGKey(0)
    k_small, k_large, k_p = jax.random.split(key, 3)
    params = make_params(k_p, input_dim, bottle_dim)

    # Small single-shot case (batch=2 -> padded to one 8-row, 128-lane tile).
    x_small = jax.random.normal(k_small, (2, input_dim), jnp.float32)
    y_small, aux = neural_network1(x_small, params, input_dim=input_dim,
                                   bottle_dim=bottle_dim)
    y_small = jax.block_until_ready(y_small)
    assert y_small.shape == (2, input_dim), y_small.shape
    assert aux.shape == (1,), aux.shape
    err = float(jnp.max(jnp.abs(y_small - _reference(x_small, params, input_dim=input_dim))))
    assert err < 5e-2, f"small-batch mismatch: {err}"

    # Batched case exercising the grid (512 rows -> 2 tiles of 256, weights pinned in VMEM).
    x_large = jax.random.normal(k_large, (512, input_dim), jnp.float32)
    y_large, _ = neural_network1(x_large, params, input_dim=input_dim,
                                 bottle_dim=bottle_dim, tile_b=256)
    y_large = jax.block_until_ready(y_large)
    assert y_large.shape == (512, input_dim), y_large.shape
    err = float(jnp.max(jnp.abs(y_large - _reference(x_large, params, input_dim=input_dim))))
    assert err < 5e-2, f"batched mismatch: {err}"

    print("KERNEL_OK")
</pallas_src>

<mosaic_0001>
module attributes {stable_mosaic.version = 11 : i64} {
  func.func @_nn1_kernel(%arg0: i32, %arg1: memref<8x128xf32, #tpu.memory_space<vmem>>, %arg2: memref<128x512xbf16, #tpu.memory_space<vmem>>, %arg3: memref<1x512xf32, #tpu.memory_space<vmem>>, %arg4: memref<512x128xbf16, #tpu.memory_space<vmem>>, %arg5: memref<1x128xf32, #tpu.memory_space<vmem>>, %arg6: memref<128x512xbf16, #tpu.memory_space<vmem>>, %arg7: memref<1x512xf32, #tpu.memory_space<vmem>>, %arg8: memref<512x128xbf16, #tpu.memory_space<vmem>>, %arg9: memref<1x128xf32, #tpu.memory_space<vmem>>, %arg10: memref<8x128xf32, #tpu.memory_space<vmem>>) attributes {dimension_semantics = [#tpu.dimension_semantics<parallel>], iteration_bounds = array<i64: 1>, scalar_prefetch = 0 : i64, scratch_operands = 0 : i64, tpu.core_type = #tpu.core_type<tc>, window_params = [{transform_indices = @transform_0, window_bounds = array<i64: 8, 128>}, {pipeline_mode = #tpu.pipeline_mode<synchronous>, transform_indices = @transform_1, window_bounds = array<i64: 128, 512>}, {pipeline_mode = #tpu.pipeline_mode<synchronous>, transform_indices = @transform_2, window_bounds = array<i64: 1, 512>}, {pipeline_mode = #tpu.pipeline_mode<synchronous>, transform_indices = @transform_3, window_bounds = array<i64: 512, 128>}, {pipeline_mode = #tpu.pipeline_mode<synchronous>, transform_indices = @transform_4, window_bounds = array<i64: 1, 128>}, {pipeline_mode = #tpu.pipeline_mode<synchronous>, transform_indices = @transform_5, window_bounds = array<i64: 128, 512>}, {pipeline_mode = #tpu.pipeline_mode<synchronous>, transform_indices = @transform_6, window_bounds = array<i64: 1, 512>}, {pipeline_mode = #tpu.pipeline_mode<synchronous>, transform_indices = @transform_7, window_bounds = array<i64: 512, 128>}, {pipeline_mode = #tpu.pipeline_mode<synchronous>, transform_indices = @transform_8, window_bounds = array<i64: 1, 128>}, {transform_indices = @transform_9, window_bounds = array<i64: 8, 128>}]} {
    %c0 = arith.constant 0 : index
    %c0_0 = arith.constant 0 : index
    %0 = vector.load %arg1[%c0, %c0_0] : memref<8x128xf32, #tpu.memory_space<vmem>>, vector<8x128xf32>
    %1 = arith.truncf %0 : vector<8x128xf32> to vector<8x128xbf16>
    %c0_1 = arith.constant 0 : index
    %c0_2 = arith.constant 0 : index
    %2 = vector.load %arg2[%c0_1, %c0_2] : memref<128x512xbf16, #tpu.memory_space<vmem>>, vector<128x512xbf16>
    %cst = arith.constant dense<0.000000e+00> : vector<8x512xf32>
    %3 = tpu.matmul %1, %2, %cst {dimension_numbers = #tpu.dot_dimension_numbers<[1], [0], [0], [1], [0, 0, 1, 1], [], []>} : vector<8x128xbf16>, vector<128x512xbf16>, vector<8x512xf32> -> vector<8x512xf32>
    %c0_3 = arith.constant 0 : index
    %c0_4 = arith.constant 0 : index
    %4 = vector.load %arg3[%c0_3, %c0_4] : memref<1x512xf32, #tpu.memory_space<vmem>>, vector<1x512xf32>
    %5 = vector.broadcast %4 : vector<1x512xf32> to vector<8x512xf32>
    %6 = arith.addf %3, %5 : vector<8x512xf32>
    %cst_5 = arith.constant 0.000000e+00 : f32
    %7 = vector.broadcast %cst_5 : f32 to vector<8x512xf32>
    %8 = arith.maximumf %6, %7 : vector<8x512xf32>
    %9 = arith.truncf %8 : vector<8x512xf32> to vector<8x512xbf16>
    %c0_6 = arith.constant 0 : index
    %c0_7 = arith.constant 0 : index
    %10 = vector.load %arg4[%c0_6, %c0_7] : memref<512x128xbf16, #tpu.memory_space<vmem>>, vector<512x128xbf16>
    %cst_8 = arith.constant dense<0.000000e+00> : vector<8x128xf32>
    %11 = tpu.matmul %9, %10, %cst_8 {dimension_numbers = #tpu.dot_dimension_numbers<[1], [0], [0], [1], [0, 0, 1, 1], [], []>} : vector<8x512xbf16>, vector<512x128xbf16>, vector<8x128xf32> -> vector<8x128xf32>
    %c0_9 = arith.constant 0 : index
    %c0_10 = arith.constant 0 : index
    %12 = vector.load %arg5[%c0_9, %c0_10] : memref<1x128xf32, #tpu.memory_space<vmem>>, vector<1x128xf32>
    %13 = vector.broadcast %12 : vector<1x128xf32> to vector<8x128xf32>
    %14 = arith.addf %11, %13 : vector<8x128xf32>
    %cst_11 = arith.constant 0.000000e+00 : f32
    %15 = vector.broadcast %cst_11 : f32 to vector<8x128xf32>
    %16 = arith.maximumf %14, %15 : vector<8x128xf32>
    %17 = arith.truncf %16 : vector<8x128xf32> to vector<8x128xbf16>
    %c0_12 = arith.constant 0 : index
    %c0_13 = arith.constant 0 : index
    %18 = vector.load %arg6[%c0_12, %c0_13] : memref<128x512xbf16, #tpu.memory_space<vmem>>, vector<128x512xbf16>
    %cst_14 = arith.constant dense<0.000000e+00> : vector<8x512xf32>
    %19 = tpu.matmul %17, %18, %cst_14 {dimension_numbers = #tpu.dot_dimension_numbers<[1], [0], [0], [1], [0, 0, 1, 1], [], []>} : vector<8x128xbf16>, vector<128x512xbf16>, vector<8x512xf32> -> vector<8x512xf32>
    %c0_15 = arith.constant 0 : index
    %c0_16 = arith.constant 0 : index
    %20 = vector.load %arg7[%c0_15, %c0_16] : memref<1x512xf32, #tpu.memory_space<vmem>>, vector<1x512xf32>
    %21 = vector.broadcast %20 : vector<1x512xf32> to vector<8x512xf32>
    %22 = arith.addf %19, %21 : vector<8x512xf32>
    %cst_17 = arith.constant 0.000000e+00 : f32
    %23 = vector.broadcast %cst_17 : f32 to vector<8x512xf32>
    %24 = arith.maximumf %22, %23 : vector<8x512xf32>
    %25 = arith.truncf %24 : vector<8x512xf32> to vector<8x512xbf16>
    %c0_18 = arith.constant 0 : index
    %c0_19 = arith.constant 0 : index
    %26 = vector.load %arg8[%c0_18, %c0_19] : memref<512x128xbf16, #tpu.memory_space<vmem>>, vector<512x128xbf16>
    %cst_20 = arith.constant dense<0.000000e+00> : vector<8x128xf32>
    %27 = tpu.matmul %25, %26, %cst_20 {dimension_numbers = #tpu.dot_dimension_numbers<[1], [0], [0], [1], [0, 0, 1, 1], [], []>} : vector<8x512xbf16>, vector<512x128xbf16>, vector<8x128xf32> -> vector<8x128xf32>
    %c0_21 = arith.constant 0 : index
    %c0_22 = arith.constant 0 : index
    %28 = vector.load %arg9[%c0_21, %c0_22] : memref<1x128xf32, #tpu.memory_space<vmem>>, vector<1x128xf32>
    %29 = vector.broadcast %28 : vector<1x128xf32> to vector<8x128xf32>
    %30 = arith.addf %27, %29 : vector<8x128xf32>
    %c0_23 = arith.constant 0 : index
    %c0_24 = arith.constant 0 : index
    %31 = vector.load %arg10[%c0_23, %c0_24] : memref<8x128xf32, #tpu.memory_space<vmem>>, vector<8x128xf32>
    tpu.vector_store %arg10[%c0_23, %c0_24], %30 {strides = array<i32>} : memref<8x128xf32, #tpu.memory_space<vmem>>, vector<8x128xf32>,
    return
  }
  func.func @transform_0(%arg0: i32) -> (i32, i32) {
    %c0_i32 = arith.constant 0 : i32
    %c0_i32_0 = arith.constant 0 : i32
    return %arg0, %c0_i32 : i32, i32
  }
  func.func @transform_1(%arg0: i32) -> (i32, i32) {
    %c0_i32 = arith.constant 0 : i32
    %c0_i32_0 = arith.constant 0 : i32
    %c0_i32_1 = arith.constant 0 : i32
    return %c0_i32, %c0_i32_0 : i32, i32
  }
  func.func @transform_2(%arg0: i32) -> (i32, i32) {
    %c0_i32 = arith.constant 0 : i32
    %c0_i32_0 = arith.constant 0 : i32
    %c0_i32_1 = arith.constant 0 : i32
    return %c0_i32, %c0_i32_0 : i32, i32
  }
  func.func @transform_3(%arg0: i32) -> (i32, i32) {
    %c0_i32 = arith.constant 0 : i32
    %c0_i32_0 = arith.constant 0 : i32
    %c0_i32_1 = arith.constant 0 : i32
    return %c0_i32, %c0_i32_0 : i32, i32
  }
  func.func @transform_4(%arg0: i32) -> (i32, i32) {
    %c0_i32 = arith.constant 0 : i32
    %c0_i32_0 = arith.constant 0 : i32
    %c0_i32_1 = arith.constant 0 : i32
    return %c0_i32, %c0_i32_0 : i32, i32
  }
  func.func @transform_5(%arg0: i32) -> (i32, i32) {
    %c0_i32 = arith.constant 0 : i32
    %c0_i32_0 = arith.constant 0 : i32
    %c0_i32_1 = arith.constant 0 : i32
    return %c0_i32, %c0_i32_0 : i32, i32
  }
  func.func @transform_6(%arg0: i32) -> (i32, i32) {
    %c0_i32 = arith.constant 0 : i32
    %c0_i32_0 = arith.constant 0 : i32
    %c0_i32_1 = arith.constant 0 : i32
    return %c0_i32, %c0_i32_0 : i32, i32
  }
  func.func @transform_7(%arg0: i32) -> (i32, i32) {
    %c0_i32 = arith.constant 0 : i32
    %c0_i32_0 = arith.constant 0 : i32
    %c0_i32_1 = arith.constant 0 : i32
    return %c0_i32, %c0_i32_0 : i32, i32
  }
  func.func @transform_8(%arg0: i32) -> (i32, i32) {
    %c0_i32 = arith.constant 0 : i32
    %c0_i32_0 = arith.constant 0 : i32
    %c0_i32_1 = arith.constant 0 : i32
    return %c0_i32, %c0_i32_0 : i32, i32
  }
  func.func @transform_9(%arg0: i32) -> (i32, i32) {
    %c0_i32 = arith.constant 0 : i32
    %c0_i32_0 = arith.constant 0 : i32
    return %arg0, %c0_i32 : i32, i32
  }
}

</mosaic_0001>

<llo_original>
// kernel: tpu_custom_call.1
$region0: #{tpu_custom_call.1}
  #allocation0 [shape = 'u32[]', space=smem, size = 0x4, offset = 0x4, fixed_abs, tag = 'smem constant byte address 0x4 - core index']
  #allocation1 [shape = 'u32[72,128]{1,0:T(1,128)}', space=vmem, size = 0x9000, scoped, tag = 'internal scratch']
  %s0 = inlined_call_operand.hbm [shape: f32[8,128], index: 0, kind: input, shape index: {}]
  %s1 = inlined_call_operand.hbm [shape: bf16[128,512], index: 1, kind: input, shape index: {}]
  %s2 = inlined_call_operand.hbm [shape: f32[1,512], index: 2, kind: input, shape index: {}]
  %s3 = inlined_call_operand.hbm [shape: bf16[512,128], index: 3, kind: input, shape index: {}]
  %s4 = inlined_call_operand.vmem [shape: f32[1,128], index: 4, kind: input, shape index: {}]
  %s5 = inlined_call_operand.hbm [shape: bf16[128,512], index: 5, kind: input, shape index: {}]
  %s6 = inlined_call_operand.vmem [shape: f32[1,512], index: 6, kind: input, shape index: {}]
  %s7 = inlined_call_operand.hbm [shape: bf16[512,128], index: 7, kind: input, shape index: {}]
  %s8 = inlined_call_operand.vmem [shape: f32[1,128], index: 8, kind: input, shape index: {}]
  %s9 = inlined_call_operand.hbm [shape: f32[8,128], index: 9, kind: output, shape index: {}]
  %s10 = sld [smem:[#allocation0]]
  $region70: #{tpu_custom_call.1} parent=0
    _
  %s12 = ssub.s32 1, %s10
  %s13 = scalar_select 0, %s12, %s10
  $region1: #{tpu_custom_call.1} parent=0
    #allocation2 [shape = 'u8[4096]{0}', space=vmem, size = 0x1000, scoped, tag = 'input window, operand 0, single buffered']
    #allocation3 [shape = 's32[1]{0}', space=sflag, size = 0x4, scoped, tag = 'scoped memory for tpu_custom_call.1']
    #allocation4 [shape = 's32[1]{0}', space=sflag, size = 0x4, scoped, tag = 'scoped memory for tpu_custom_call.1']
    #allocation5 [shape = 'u8[131072]{0}', space=vmem, size = 0x20000, scoped, tag = 'input window, operand 1, single buffered']
    #allocation6 [shape = 's32[1]{0}', space=sflag, size = 0x4, scoped, tag = 'scoped memory for tpu_custom_call.1']
    #allocation7 [shape = 'u8[2048]{0}', space=vmem, size = 0x800, scoped, tag = 'input window, operand 2, single buffered']
    #allocation8 [shape = 'u8[131072]{0}', space=vmem, size = 0x20000, scoped, tag = 'input window, operand 3, single buffered']
    #allocation9 [shape = 's32[1]{0}', space=sflag, size = 0x4, scoped, tag = 'scoped memory for tpu_custom_call.1']
    #allocation10 [shape = 'u8[131072]{0}', space=vmem, size = 0x20000, scoped, tag = 'input window, operand 5, single buffered']
    #allocation11 [shape = 'u8[131072]{0}', space=vmem, size = 0x20000, scoped, tag = 'input window, operand 7, single buffered']
    #allocation12 [shape = 's32[1]{0}', space=sflag, size = 0x4, scoped, tag = 'scoped memory for tpu_custom_call.1']
    #allocation13 [shape = 'u8[4096]{0}', space=vmem, size = 0x1000, scoped, tag = 'output window, operand 0, single buffered']
    %14 = vsyncpa [#allocation3], 0
    %15 = vsyncpa [#allocation6], 0
    %16 = vsyncpa [#allocation9], 0
    %17 = vsyncpa [#allocation12], 0
    %18 = vsyncpa [#allocation4], 0
    // Predicated region
    $region2: #{tpu_custom_call.1} parent=1 // pred_check
      _
    $region3: #{tpu_custom_call.1} parent=1 // pred_check_branch
      %20 = sbr.rel (0) target = $region5
    $region4: #{tpu_custom_call.1} parent=1 // pred_region
      %22 = vsyncadd [#allocation3], 0
      %s24 = sshll.u32 %s0, 4
      %s25 = int_to_ptr.hbm [resolvable:$true] %s24
      %s26 = sshll.u32 [#allocation2], 4
      %s27 = int_to_ptr.vmem [resolvable:$true] %s26
      %29 = dma.hbm_to_vmem [thread:$0]  %s25, 128, %s27, [#allocation3]
    $region5: #{tpu_custom_call.1} parent=1 // pred_fallthru
      _
    // Predicated region
    $region6: #{tpu_custom_call.1} parent=1 // pred_check
      _
    $region7: #{tpu_custom_call.1} parent=1 // pred_check_branch
      %31 = sbr.rel (0) target = $region9
    $region8: #{tpu_custom_call.1} parent=1 // pred_region
      %33 = vsyncadd [#allocation6], 0
      %s34 = sshll.u32 %s1, 4
      %s35 = int_to_ptr.hbm [resolvable:$true] %s34
      %s36 = sshll.u32 [#allocation5], 4
      %s37 = int_to_ptr.vmem [resolvable:$true] %s36
      %42 = dma.hbm_to_vmem [thread:$0]  %s35, 4096, %s37, [#allocation6], 256, 256, 16
    $region9: #{tpu_custom_call.1} parent=1 // pred_fallthru
      _
    // Predicated region
    $region10: #{tpu_custom_call.1} parent=1 // pred_check
      _
    $region11: #{tpu_custom_call.1} parent=1 // pred_check_branch
      %44 = sbr.rel (0) target = $region13
    $region12: #{tpu_custom_call.1} parent=1 // pred_region
      %46 = vsyncadd [#allocation6], 0
      %s48 = sshll.u32 %s2, 4
      %s49 = int_to_ptr.hbm [resolvable:$true] %s48
      %s50 = sshll.u32 [#allocation7], 4
      %s51 = int_to_ptr.vmem [resolvable:$true] %s50
      %53 = dma.hbm_to_vmem [thread:$0]  %s49, 64, %s51, [#allocation6]
    $region13: #{tpu_custom_call.1} parent=1 // pred_fallthru
      _
    // Predicated region
    $region14: #{tpu_custom_call.1} parent=1 // pred_check
      _
    $region15: #{tpu_custom_call.1} parent=1 // pred_check_branch
      %55 = sbr.rel (0) target = $region17
    $region16: #{tpu_custom_call.1} parent=1 // pred_region
      %57 = vsyncadd [#allocation9], 0
      %s58 = sshll.u32 %s3, 4
      %s59 = int_to_ptr.hbm [resolvable:$true] %s58
      %s60 = sshll.u32 [#allocation8], 4
      %s61 = int_to_ptr.vmem [resolvable:$true] %s60
      %66 = dma.hbm_to_vmem [thread:$0]  %s59, 4096, %s61, [#allocation9], 64, 64, 4
    $region17: #{tpu_custom_call.1} parent=1 // pred_fallthru
      _
    // Predicated region
    $region18: #{tpu_custom_call.1} parent=1 // pred_check
      _
    $region19: #{tpu_custom_call.1} parent=1 // pred_check_branch
      %68 = sbr.rel (0) target = $region21
    $region20: #{tpu_custom_call.1} parent=1 // pred_region
      _
    $region21: #{tpu_custom_call.1} parent=1 // pred_fallthru
      _
    // Predicated region
    $region22: #{tpu_custom_call.1} parent=1 // pred_check
      _
    $region23: #{tpu_custom_call.1} parent=1 // pred_check_branch
      %70 = sbr.rel (0) target = $region25
    $region24: #{tpu_custom_call.1} parent=1 // pred_region
      %72 = vsyncadd [#allocation9], 0
      %s73 = sshll.u32 %s5, 4
      %s74 = int_to_ptr.hbm [resolvable:$true] %s73
      %s75 = sshll.u32 [#allocation10], 4
      %s76 = int_to_ptr.vmem [resolvable:$true] %s75
      %81 = dma.hbm_to_vmem [thread:$0]  %s74, 4096, %s76, [#allocation9], 256, 256, 16
    $region25: #{tpu_custom_call.1} parent=1 // pred_fallthru
      _
    // Predicated region
    $region26: #{tpu_custom_call.1} parent=1 // pred_check
      _
    $region27: #{tpu_custom_call.1} parent=1 // pred_check_branch
      %83 = sbr.rel (0) target = $region29
    $region28: #{tpu_custom_call.1} parent=1 // pred_region
      _
    $region29: #{tpu_custom_call.1} parent=1 // pred_fallthru
      _
    // Predicated region
    $region30: #{tpu_custom_call.1} parent=1 // pred_check
      _
    $region31: #{tpu_custom_call.1} parent=1 // pred_check_branch
      %85 = sbr.rel (0) target = $region33
    $region32: #{tpu_custom_call.1} parent=1 // pred_region
      %87 = vsyncadd [#allocation12], 0
      %s88 = sshll.u32 %s7, 4
      %s89 = int_to_ptr.hbm [resolvable:$true] %s88
      %s90 = sshll.u32 [#allocation11], 4
      %s91 = int_to_ptr.vmem [resolvable:$true] %s90
      %96 = dma.hbm_to_vmem [thread:$0]  %s89, 4096, %s91, [#allocation12], 64, 64, 4
    $region33: #{tpu_custom_call.1} parent=1 // pred_fallthru
      _
    // Predicated region
    $region34: #{tpu_custom_call.1} parent=1 // pred_check
      _
    $region35: #{tpu_custom_call.1} parent=1 // pred_check_branch
      %98 = sbr.rel (0) target = $region37
    $region36: #{tpu_custom_call.1} parent=1 // pred_region
      _
    $region37: #{tpu_custom_call.1} parent=1 // pred_fallthru
      _
    // Predicated region
    $region38: #{tpu_custom_call.1} parent=1 // pred_check
      _
    $region39: #{tpu_custom_call.1} parent=1 // pred_check_branch
      %100 = sbr.rel (0) target = $region41
    $region40: #{tpu_custom_call.1} parent=1 // pred_region
      %102 = dma.done [#allocation3], 128
    $region41: #{tpu_custom_call.1} parent=1 // pred_fallthru
      _
    // Predicated region
    $region42: #{tpu_custom_call.1} parent=1 // pred_check
      _
    $region43: #{tpu_custom_call.1} parent=1 // pred_check_branch
      %104 = sbr.rel (0) target = $region45
    $region44: #{tpu_custom_call.1} parent=1 // pred_region
      %106 = dma.done [#allocation6], 4096
    $region45: #{tpu_custom_call.1} parent=1 // pred_fallthru
      _
    // Predicated region
    $region46: #{tpu_custom_call.1} parent=1 // pred_check
      _
    $region47: #{tpu_custom_call.1} parent=1 // pred_check_branch
      %108 = sbr.rel (0) target = $region49
    $region48: #{tpu_custom_call.1} parent=1 // pred_region
      %110 = dma.done [#allocation6], 64
    $region49: #{tpu_custom_call.1} parent=1 // pred_fallthru
      _
    // Predicated region
    $region50: #{tpu_custom_call.1} parent=1 // pred_check
      _
    $region51: #{tpu_custom_call.1} parent=1 // pred_check_branch
      %112 = sbr.rel (0) target = $region53
    $region52: #{tpu_custom_call.1} parent=1 // pred_region
      %114 = dma.done [#allocation9], 4096
    $region53: #{tpu_custom_call.1} parent=1 // pred_fallthru
      _
    // Predicated region
    $region54: #{tpu_custom_call.1} parent=1 // pred_check
      _
    $region55: #{tpu_custom_call.1} parent=1 // pred_check_branch
      %116 = sbr.rel (0) target = $region57
    $region56: #{tpu_custom_call.1} parent=1 // pred_region
      %118 = dma.done [#allocation9], 4096
    $region57: #{tpu_custom_call.1} parent=1 // pred_fallthru
      _
    // Predicated region
    $region58: #{tpu_custom_call.1} parent=1 // pred_check
      _
    $region59: #{tpu_custom_call.1} parent=1 // pred_check_branch
      %120 = sbr.rel (0) target = $region61
    $region60: #{tpu_custom_call.1} parent=1 // pred_region
      %122 = dma.done [#allocation12], 4096
    $region61: #{tpu_custom_call.1} parent=1 // pred_fallthru
      _
    %v123 = vld [vmem:[#allocation2] sm:$0xff]
    %v124 = vpack.c.bf16 %v123, %v123
    %v125 = vld [vmem:[#allocation5] sm:$0xff]
    %v126 = vld [vmem:[#allocation5 + $0x8] sm:$0xff]
    %v127 = vld [vmem:[#allocation5 + $0x10] sm:$0xff]
    %v128 = vld [vmem:[#allocation5 + $0x18] sm:$0xff]
    %v129 = vld [vmem:[#allocation5 + $0x20] sm:$0xff]
    %v130 = vld [vmem:[#allocation5 + $0x28] sm:$0xff]
    %v131 = vld [vmem:[#allocation5 + $0x30] sm:$0xff]
    %v132 = vld [vmem:[#allocation5 + $0x38] sm:$0xff]
    %v133 = vld [vmem:[#allocation5 + $0x40] sm:$0xff]
    %v134 = vld [vmem:[#allocation5 + $0x48] sm:$0xff]
    %v135 = vld [vmem:[#allocation5 + $0x50] sm:$0xff]
    %v136 = vld [vmem:[#allocation5 + $0x58] sm:$0xff]
    %v137 = vld [vmem:[#allocation5 + $0x60] sm:$0xff]
    %v138 = vld [vmem:[#allocation5 + $0x68] sm:$0xff]
    %v139 = vld [vmem:[#allocation5 + $0x70] sm:$0xff]
    %v140 = vld [vmem:[#allocation5 + $0x78] sm:$0xff]
    %v141 = vld [vmem:[#allocation5 + $0x80] sm:$0xff]
    %v142 = vld [vmem:[#allocation5 + $0x88] sm:$0xff]
    %v143 = vld [vmem:[#allocation5 + $0x90] sm:$0xff]
    %v144 = vld [vmem:[#allocation5 + $0x98] sm:$0xff]
    %v145 = vld [vmem:[#allocation5 + $0xa0] sm:$0xff]
    %v146 = vld [vmem:[#allocation5 + $0xa8] sm:$0xff]
    %v147 = vld [vmem:[#allocation5 + $0xb0] sm:$0xff]
    %v148 = vld [vmem:[#allocation5 + $0xb8] sm:$0xff]
    %v149 = vld [vmem:[#allocation5 + $0xc0] sm:$0xff]
    %v150 = vld [vmem:[#allocation5 + $0xc8] sm:$0xff]
    %v151 = vld [vmem:[#allocation5 + $0xd0] sm:$0xff]
    %v152 = vld [vmem:[#allocation5 + $0xd8] sm:$0xff]
    %v153 = vld [vmem:[#allocation5 + $0xe0] sm:$0xff]
    %v154 = vld [vmem:[#allocation5 + $0xe8] sm:$0xff]
    %v155 = vld [vmem:[#allocation5 + $0xf0] sm:$0xff]
    %v156 = vld [vmem:[#allocation5 + $0xf8] sm:$0xff]
    %v157 = vld [vmem:[#allocation7] sm:$0xf]
    %v159 = vperm.slane %v157, 0
    %v160 = vperm.slane %v157, 1
    %v161 = vperm.slane %v157, 2
    %v162 = vperm.slane %v157, 3
    %v199 = vunpack.c.l.b16 %v125
    %v200 = vunpack.c.h.b16 %v125
    %v201 = vunpack.c.l.b16 %v126
    %v202 = vunpack.c.h.b16 %v126
    %v203 = vunpack.c.l.b16 %v127
    %v204 = vunpack.c.h.b16 %v127
    %v205 = vunpack.c.l.b16 %v128
    %v206 = vunpack.c.h.b16 %v128
    %v207 = vunpack.c.l.b16 %v129
    %v208 = vunpack.c.h.b16 %v129
    %v209 = vunpack.c.l.b16 %v130
    %v210 = vunpack.c.h.b16 %v130
    %v211 = vunpack.c.l.b16 %v131
    %v212 = vunpack.c.h.b16 %v131
    %v213 = vunpack.c.l.b16 %v132
    %v214 = vunpack.c.h.b16 %v132
    %v215 = vunpack.c.l.b16 %v133
    %v216 = vunpack.c.h.b16 %v133
    %v217 = vunpack.c.l.b16 %v134
    %v218 = vunpack.c.h.b16 %v134
    %v219 = vunpack.c.l.b16 %v135
    %v220 = vunpack.c.h.b16 %v135
    %v221 = vunpack.c.l.b16 %v136
    %v222 = vunpack.c.h.b16 %v136
    %v223 = vunpack.c.l.b16 %v137
    %v224 = vunpack.c.h.b16 %v137
    %v225 = vunpack.c.l.b16 %v138
    %v226 = vunpack.c.h.b16 %v138
    %v227 = vunpack.c.l.b16 %v139
    %v228 = vunpack.c.h.b16 %v139
    %v229 = vunpack.c.l.b16 %v140
    %v230 = vunpack.c.h.b16 %v140
    %v231 = vunpack.c.l.b16 %v141
    %v232 = vunpack.c.h.b16 %v141
    %v233 = vunpack.c.l.b16 %v142
    %v234 = vunpack.c.h.b16 %v142
    %v235 = vunpack.c.l.b16 %v143
    %v236 = vunpack.c.h.b16 %v143
    %v237 = vunpack.c.l.b16 %v144
    %v238 = vunpack.c.h.b16 %v144
    %v239 = vunpack.c.l.b16 %v145
    %v240 = vunpack.c.h.b16 %v145
    %v241 = vunpack.c.l.b16 %v146
    %v242 = vunpack.c.h.b16 %v146
    %v243 = vunpack.c.l.b16 %v147
    %v244 = vunpack.c.h.b16 %v147
    %v245 = vunpack.c.l.b16 %v148
    %v246 = vunpack.c.h.b16 %v148
    %v247 = vunpack.c.l.b16 %v149
    %v248 = vunpack.c.h.b16 %v149
    %v249 = vunpack.c.l.b16 %v150
    %v250 = vunpack.c.h.b16 %v150
    %v251 = vunpack.c.l.b16 %v151
    %v252 = vunpack.c.h.b16 %v151
    %v253 = vunpack.c.l.b16 %v152
    %v254 = vunpack.c.h.b16 %v152
    %v255 = vunpack.c.l.b16 %v153
    %v256 = vunpack.c.h.b16 %v153
    %v257 = vunpack.c.l.b16 %v154
    %v258 = vunpack.c.h.b16 %v154
    %v259 = vunpack.c.l.b16 %v155
    %v260 = vunpack.c.h.b16 %v155
    %v261 = vunpack.c.l.b16 %v156
    %v262 = vunpack.c.h.b16 %v156
    %v263 = vpack.c.b16 %v203, %v199
    %v264 = vpack.c.b16 %v204, %v200
    %v265 = vpack.c.b16 %v205, %v201
    %v266 = vpack.c.b16 %v206, %v202
    %v267 = vpack.c.b16 %v211, %v207
    %v268 = vpack.c.b16 %v212, %v208
    %v269 = vpack.c.b16 %v213, %v209
    %v270 = vpack.c.b16 %v214, %v210
    %v271 = vpack.c.b16 %v219, %v215
    %v272 = vpack.c.b16 %v220, %v216
    %v273 = vpack.c.b16 %v221, %v217
    %v274 = vpack.c.b16 %v222, %v218
    %v275 = vpack.c.b16 %v227, %v223
    %v276 = vpack.c.b16 %v228, %v224
    %v277 = vpack.c.b16 %v229, %v225
    %v278 = vpack.c.b16 %v230, %v226
    %v279 = vpack.c.b16 %v235, %v231
    %v280 = vpack.c.b16 %v236, %v232
    %v281 = vpack.c.b16 %v237, %v233
    %v282 = vpack.c.b16 %v238, %v234
    %v283 = vpack.c.b16 %v243, %v239
    %v284 = vpack.c.b16 %v244, %v240
    %v285 = vpack.c.b16 %v245, %v241
    %v286 = vpack.c.b16 %v246, %v242
    %v287 = vpack.c.b16 %v251, %v247
    %v288 = vpack.c.b16 %v252, %v248
    %v289 = vpack.c.b16 %v253, %v249
    %v290 = vpack.c.b16 %v254, %v250
    %v291 = vpack.c.b16 %v259, %v255
    %v292 = vpack.c.b16 %v260, %v256
    %v293 = vpack.c.b16 %v261, %v257
    %v294 = vpack.c.b16 %v262, %v258
    %327 = vmatpush.bf16.msra.mxu0 %v291
    %328 = vmatpush.bf16.msra.mxu0 %v287
    %329 = vmatpush.bf16.msra.mxu0 %v283
    %330 = vmatpush.bf16.msra.mxu0 %v279
    %331 = vmatpush.bf16.msra.mxu0 %v275
    %332 = vmatpush.bf16.msra.mxu0 %v271
    %333 = vmatpush.bf16.msra.mxu0 %v267
    %334 = vmatpush.bf16.msra.mxu0 %v263
    %335 = vmatmul.bf16.gmra.mxu0 %v124
    %v336 = vpop.f32.mrf.mxu0
    %v337 = vadd.f32 %v159, %v336
    %v338 = vpop.f32.mrf.mxu0
    %339 = vdwg.mxu0
    %340 = vmatpush.bf16.msra.mxu0 %v292
    %341 = vmatpush.bf16.msra.mxu0 %v288
    %342 = vmatpush.bf16.msra.mxu0 %v284
    %343 = vmatpush.bf16.msra.mxu0 %v280
    %344 = vmatpush.bf16.msra.mxu0 %v276
    %345 = vmatpush.bf16.msra.mxu0 %v272
    %346 = vmatpush.bf16.msra.mxu0 %v268
    %347 = vmatpush.bf16.msra.mxu0 %v264
    %348 = vmatmul.bf16.gmra.mxu0 %v124
    %v349 = vpop.f32.mrf.mxu0
    %v350 = vadd.f32 %v160, %v349
    %v351 = vpop.f32.mrf.mxu0
    %352 = vdwg.mxu0
    %353 = vmatpush.bf16.msra.mxu0 %v293
    %354 = vmatpush.bf16.msra.mxu0 %v289
    %355 = vmatpush.bf16.msra.mxu0 %v285
    %356 = vmatpush.bf16.msra.mxu0 %v281
    %357 = vmatpush.bf16.msra.mxu0 %v277
    %358 = vmatpush.bf16.msra.mxu0 %v273
    %359 = vmatpush.bf16.msra.mxu0 %v269
    %360 = vmatpush.bf16.msra.mxu0 %v265
    %361 = vmatmul.bf16.gmra.mxu0 %v124
    %v362 = vpop.f32.mrf.mxu0
    %v363 = vadd.f32 %v161, %v362
    %v364 = vpop.f32.mrf.mxu0
    %365 = vdwg.mxu0
    %366 = vmatpush.bf16.msra.mxu0 %v294
    %367 = vmatpush.bf16.msra.mxu0 %v290
    %368 = vmatpush.bf16.msra.mxu0 %v286
    %369 = vmatpush.bf16.msra.mxu0 %v282
    %370 = vmatpush.bf16.msra.mxu0 %v278
    %371 = vmatpush.bf16.msra.mxu0 %v274
    %372 = vmatpush.bf16.msra.mxu0 %v270
    %373 = vmatpush.bf16.msra.mxu0 %v266
    %374 = vmatmul.bf16.gmra.mxu0 %v124
    %v375 = vpop.f32.mrf.mxu0
    %v376 = vadd.f32 %v162, %v375
    %v377 = vpop.f32.mrf.mxu0
    %378 = vdwg.mxu0
    %v379 = vmax.f32 %v337, 0.0
    %v380 = vmax.f32 %v350, 0.0
    %v381 = vmax.f32 %v363, 0.0
    %v382 = vmax.f32 %v376, 0.0
    %v383 = vpack.c.bf16 %v379, %v379
    %v384 = vpack.c.bf16 %v380, %v380
    %v385 = vpack.c.bf16 %v381, %v381
    %v386 = vpack.c.bf16 %v382, %v382
    %v387 = vld [vmem:[#allocation8] sm:$0xf]
    %v388 = vld [vmem:[#allocation8 + $0x4] sm:$0xf]
    %v389 = vld [vmem:[#allocation8 + $0x8] sm:$0xf]
    %v390 = vld [vmem:[#allocation8 + $0xc] sm:$0xf]
    %v391 = vld [vmem:[#allocation8 + $0x10] sm:$0xf]
    %v392 = vld [vmem:[#allocation8 + $0x14] sm:$0xf]
    %v393 = vld [vmem:[#allocation8 + $0x18] sm:$0xf]
    %v394 = vld [vmem:[#allocation8 + $0x1c] sm:$0xf]
    %v395 = vld [vmem:[#allocation8 + $0x20] sm:$0xf]
    %v396 = vld [vmem:[#allocation8 + $0x24] sm:$0xf]
    %v397 = vld [vmem:[#allocation8 + $0x28] sm:$0xf]
    %v398 = vld [vmem:[#allocation8 + $0x2c] sm:$0xf]
    %v399 = vld [vmem:[#allocation8 + $0x30] sm:$0xf]
    %v400 = vld [vmem:[#allocation8 + $0x34] sm:$0xf]
    %v401 = vld [vmem:[#allocation8 + $0x38] sm:$0xf]
    %v402 = vld [vmem:[#allocation8 + $0x3c] sm:$0xf]
    %v403 = vld [vmem:[#allocation8 + $0x40] sm:$0xf]
    %v404 = vld [vmem:[#allocation8 + $0x44] sm:$0xf]
    %v405 = vld [vmem:[#allocation8 + $0x48] sm:$0xf]
    %v406 = vld [vmem:[#allocation8 + $0x4c] sm:$0xf]
    %v407 = vld [vmem:[#allocation8 + $0x50] sm:$0xf]
    %v408 = vld [vmem:[#allocation8 + $0x54] sm:$0xf]
    %v409 = vld [vmem:[#allocation8 + $0x58] sm:$0xf]
    %v410 = vld [vmem:[#allocation8 + $0x5c] sm:$0xf]
    %v411 = vld [vmem:[#allocation8 + $0x60] sm:$0xf]
    %v412 = vld [vmem:[#allocation8 + $0x64] sm:$0xf]
    %v413 = vld [vmem:[#allocation8 + $0x68] sm:$0xf]
    %v414 = vld [vmem:[#allocation8 + $0x6c] sm:$0xf]
    %v415 = vld [vmem:[#allocation8 + $0x70] sm:$0xf]
    %v416 = vld [vmem:[#allocation8 + $0x74] sm:$0xf]
    %v417 = vld [vmem:[#allocation8 + $0x78] sm:$0xf]
    %v418 = vld [vmem:[#allocation8 + $0x7c] sm:$0xf]
    %v419 = vld [vmem:[#allocation8 + $0x80] sm:$0xf]
    %v420 = vld [vmem:[#allocation8 + $0x84] sm:$0xf]
    %v421 = vld [vmem:[#allocation8 + $0x88] sm:$0xf]
    %v422 = vld [vmem:[#allocation8 + $0x8c] sm:$0xf]
    %v423 = vld [vmem:[#allocation8 + $0x90] sm:$0xf]
    %v424 = vld [vmem:[#allocation8 + $0x94] sm:$0xf]
    %v425 = vld [vmem:[#allocation8 + $0x98] sm:$0xf]
    %v426 = vld [vmem:[#allocation8 + $0x9c] sm:$0xf]
    %v427 = vld [vmem:[#allocation8 + $0xa0] sm:$0xf]
    %v428 = vld [vmem:[#allocation8 + $0xa4] sm:$0xf]
    %v429 = vld [vmem:[#allocation8 + $0xa8] sm:$0xf]
    %v430 = vld [vmem:[#allocation8 + $0xac] sm:$0xf]
    %v431 = vld [vmem:[#allocation8 + $0xb0] sm:$0xf]
    %v432 = vld [vmem:[#allocation8 + $0xb4] sm:$0xf]
    %v433 = vld [vmem:[#allocation8 + $0xb8] sm:$0xf]
    %v434 = vld [vmem:[#allocation8 + $0xbc] sm:$0xf]
    %v435 = vld [vmem:[#allocation8 + $0xc0] sm:$0xf]
    %v436 = vld [vmem:[#allocation8 + $0xc4] sm:$0xf]
    %v437 = vld [vmem:[#allocation8 + $0xc8] sm:$0xf]
    %v438 = vld [vmem:[#allocation8 + $0xcc] sm:$0xf]
    %v439 = vld [vmem:[#allocation8 + $0xd0] sm:$0xf]
    %v440 = vld [vmem:[#allocation8 + $0xd4] sm:$0xf]
    %v441 = vld [vmem:[#allocation8 + $0xd8] sm:$0xf]
    %v442 = vld [vmem:[#allocation8 + $0xdc] sm:$0xf]
    %v443 = vld [vmem:[#allocation8 + $0xe0] sm:$0xf]
    %v444 = vld [vmem:[#allocation8 + $0xe4] sm:$0xf]
    %v445 = vld [vmem:[#allocation8 + $0xe8] sm:$0xf]
    %v446 = vld [vmem:[#allocation8 + $0xec] sm:$0xf]
    %v447 = vld [vmem:[#allocation8 + $0xf0] sm:$0xf]
    %v448 = vld [vmem:[#allocation8 + $0xf4] sm:$0xf]
    %v449 = vld [vmem:[#allocation8 + $0xf8] sm:$0xf]
    %v450 = vld [vmem:[#allocation8 + $0xfc] sm:$0xf]
    %v451 = vld [vmem:[%s4] sm:$0x1]
    %v453 = vperm.slane %v451, 0
    %v519 = vunpack.c.l.b16 %v387
    %v520 = vunpack.c.l.b16 %v388
    %v521 = vunpack.c.l.b16 %v389
    %v522 = vunpack.c.l.b16 %v390
    %v523 = vunpack.c.l.b16 %v391
    %v524 = vunpack.c.l.b16 %v392
    %v525 = vunpack.c.l.b16 %v393
    %v526 = vunpack.c.l.b16 %v394
    %v527 = vunpack.c.l.b16 %v395
    %v528 = vunpack.c.l.b16 %v396
    %v529 = vunpack.c.l.b16 %v397
    %v530 = vunpack.c.l.b16 %v398
    %v531 = vunpack.c.l.b16 %v399
    %v532 = vunpack.c.l.b16 %v400
    %v533 = vunpack.c.l.b16 %v401
    %v534 = vunpack.c.l.b16 %v402
    %v535 = vunpack.c.l.b16 %v403
    %v536 = vunpack.c.l.b16 %v404
    %v537 = vunpack.c.l.b16 %v405
    %v538 = vunpack.c.l.b16 %v406
    %v539 = vunpack.c.l.b16 %v407
    %v540 = vunpack.c.l.b16 %v408
    %v541 = vunpack.c.l.b16 %v409
    %v542 = vunpack.c.l.b16 %v410
    %v543 = vunpack.c.l.b16 %v411
    %v544 = vunpack.c.l.b16 %v412
    %v545 = vunpack.c.l.b16 %v413
    %v546 = vunpack.c.l.b16 %v414
    %v547 = vunpack.c.l.b16 %v415
    %v548 = vunpack.c.l.b16 %v416
    %v549 = vunpack.c.l.b16 %v417
    %v550 = vunpack.c.l.b16 %v418
    %v551 = vunpack.c.l.b16 %v419
    %v552 = vunpack.c.l.b16 %v420
    %v553 = vunpack.c.l.b16 %v421
    %v554 = vunpack.c.l.b16 %v422
    %v555 = vunpack.c.l.b16 %v423
    %v556 = vunpack.c.l.b16 %v424
    %v557 = vunpack.c.l.b16 %v425
    %v558 = vunpack.c.l.b16 %v426
    %v559 = vunpack.c.l.b16 %v427
    %v560 = vunpack.c.l.b16 %v428
    %v561 = vunpack.c.l.b16 %v429
    %v562 = vunpack.c.l.b16 %v430
    %v563 = vunpack.c.l.b16 %v431
    %v564 = vunpack.c.l.b16 %v432
    %v565 = vunpack.c.l.b16 %v433
    %v566 = vunpack.c.l.b16 %v434
    %v567 = vunpack.c.l.b16 %v435
    %v568 = vunpack.c.l.b16 %v436
    %v569 = vunpack.c.l.b16 %v437
    %v570 = vunpack.c.l.b16 %v438
    %v571 = vunpack.c.l.b16 %v439
    %v572 = vunpack.c.l.b16 %v440
    %v573 = vunpack.c.l.b16 %v441
    %v574 = vunpack.c.l.b16 %v442
    %v575 = vunpack.c.l.b16 %v443
    %v576 = vunpack.c.l.b16 %v444
    %v577 = vunpack.c.l.b16 %v445
    %v578 = vunpack.c.l.b16 %v446
    %v579 = vunpack.c.l.b16 %v447
    %v580 = vunpack.c.l.b16 %v448
    %v581 = vunpack.c.l.b16 %v449
    %v582 = vunpack.c.l.b16 %v450
    %v583 = vpack.c.b16 %v520, %v519
    %v584 = vpack.c.b16 %v522, %v521
    %v585 = vpack.c.b16 %v524, %v523
    %v586 = vpack.c.b16 %v526, %v525
    %v587 = vpack.c.b16 %v528, %v527
    %v588 = vpack.c.b16 %v530, %v529
    %v589 = vpack.c.b16 %v532, %v531
    %v590 = vpack.c.b16 %v534, %v533
    %v591 = vpack.c.b16 %v536, %v535
    %v592 = vpack.c.b16 %v538, %v537
    %v593 = vpack.c.b16 %v540, %v539
    %v594 = vpack.c.b16 %v542, %v541
    %v595 = vpack.c.b16 %v544, %v543
    %v596 = vpack.c.b16 %v546, %v545
    %v597 = vpack.c.b16 %v548, %v547
    %v598 = vpack.c.b16 %v550, %v549
    %v599 = vpack.c.b16 %v552, %v551
    %v600 = vpack.c.b16 %v554, %v553
    %v601 = vpack.c.b16 %v556, %v555
    %v602 = vpack.c.b16 %v558, %v557
    %v603 = vpack.c.b16 %v560, %v559
    %v604 = vpack.c.b16 %v562, %v561
    %v605 = vpack.c.b16 %v564, %v563
    %v606 = vpack.c.b16 %v566, %v565
    %v607 = vpack.c.b16 %v568, %v567
    %v608 = vpack.c.b16 %v570, %v569
    %v609 = vpack.c.b16 %v572, %v571
    %v610 = vpack.c.b16 %v574, %v573
    %v611 = vpack.c.b16 %v576, %v575
    %v612 = vpack.c.b16 %v578, %v577
    %v613 = vpack.c.b16 %v580, %v579
    %v614 = vpack.c.b16 %v582, %v581
    %647 = vmatpush.bf16.msra.mxu0 %v590
    %648 = vmatpush.bf16.msra.mxu0 %v589
    %649 = vmatpush.bf16.msra.mxu0 %v588
    %650 = vmatpush.bf16.msra.mxu0 %v587
    %651 = vmatpush.bf16.msra.mxu0 %v586
    %652 = vmatpush.bf16.msra.mxu0 %v585
    %653 = vmatpush.bf16.msra.mxu0 %v584
    %654 = vmatpush.bf16.msra.mxu0 %v583
    %655 = vmatmul.bf16.gmra.mxu0 %v383
    %v656 = vpop.f32.mrf.mxu0
    %v657 = vadd.f32 %v453, %v656
    %v658 = vpop.f32.mrf.mxu0
    %659 = vdwg.mxu0
    %660 = vmatpush.bf16.msra.mxu0 %v598
    %661 = vmatpush.bf16.msra.mxu0 %v597
    %662 = vmatpush.bf16.msra.mxu0 %v596
    %663 = vmatpush.bf16.msra.mxu0 %v595
    %664 = vmatpush.bf16.msra.mxu0 %v594
    %665 = vmatpush.bf16.msra.mxu0 %v593
    %666 = vmatpush.bf16.msra.mxu0 %v592
    %667 = vmatpush.bf16.msra.mxu0 %v591
    %668 = vmatmul.bf16.gmra.mxu0 %v384
    %v669 = vpop.f32.mrf.mxu0
    %v670 = vadd.f32 %v657, %v669
    %v671 = vpop.f32.mrf.mxu0
    %672 = vdwg.mxu0
    %673 = vmatpush.bf16.msra.mxu0 %v606
    %674 = vmatpush.bf16.msra.mxu0 %v605
    %675 = vmatpush.bf16.msra.mxu0 %v604
    %676 = vmatpush.bf16.msra.mxu0 %v603
    %677 = vmatpush.bf16.msra.mxu0 %v602
    %678 = vmatpush.bf16.msra.mxu0 %v601
    %679 = vmatpush.bf16.msra.mxu0 %v600
    %680 = vmatpush.bf16.msra.mxu0 %v599
    %681 = vmatmul.bf16.gmra.mxu0 %v385
    %v682 = vpop.f32.mrf.mxu0
    %v683 = vadd.f32 %v670, %v682
    %v684 = vpop.f32.mrf.mxu0
    %685 = vdwg.mxu0
    %686 = vmatpush.bf16.msra.mxu0 %v614
    %687 = vmatpush.bf16.msra.mxu0 %v613
    %688 = vmatpush.bf16.msra.mxu0 %v612
    %689 = vmatpush.bf16.msra.mxu0 %v611
    %690 = vmatpush.bf16.msra.mxu0 %v610
    %691 = vmatpush.bf16.msra.mxu0 %v609
    %692 = vmatpush.bf16.msra.mxu0 %v608
    %693 = vmatpush.bf16.msra.mxu0 %v607
    %694 = vmatmul.bf16.gmra.mxu0 %v386
    %v695 = vpop.f32.mrf.mxu0
    %v696 = vadd.f32 %v683, %v695
    %v697 = vpop.f32.mrf.mxu0
    %698 = vdwg.mxu0
    %v699 = vmax.f32 %v696, 0.0
    %v700 = vpack.c.bf16 %v699, %v699
    %v701 = vld [vmem:[#allocation10] sm:$0xff]
    %v702 = vld [vmem:[#allocation10 + $0x8] sm:$0xff]
    %v703 = vld [vmem:[#allocation10 + $0x10] sm:$0xff]
    %v704 = vld [vmem:[#allocation10 + $0x18] sm:$0xff]
    %v705 = vld [vmem:[#allocation10 + $0x20] sm:$0xff]
    %v706 = vld [vmem:[#allocation10 + $0x28] sm:$0xff]
    %v707 = vld [vmem:[#allocation10 + $0x30] sm:$0xff]
    %v708 = vld [vmem:[#allocation10 + $0x38] sm:$0xff]
    %v709 = vld [vmem:[#allocation10 + $0x40] sm:$0xff]
    %v710 = vld [vmem:[#allocation10 + $0x48] sm:$0xff]
    %v711 = vld [vmem:[#allocation10 + $0x50] sm:$0xff]
    %v712 = vld [vmem:[#allocation10 + $0x58] sm:$0xff]
    %v713 = vld [vmem:[#allocation10 + $0x60] sm:$0xff]
    %v714 = vld [vmem:[#allocation10 + $0x68] sm:$0xff]
    %v715 = vld [vmem:[#allocation10 + $0x70] sm:$0xff]
    %v716 = vld [vmem:[#allocation10 + $0x78] sm:$0xff]
    %v717 = vld [vmem:[#allocation10 + $0x80] sm:$0xff]
    %v718 = vld [vmem:[#allocation10 + $0x88] sm:$0xff]
    %v719 = vld [vmem:[#allocation10 + $0x90] sm:$0xff]
    %v720 = vld [vmem:[#allocation10 + $0x98] sm:$0xff]
    %v721 = vld [vmem:[#allocation10 + $0xa0] sm:$0xff]
    %v722 = vld [vmem:[#allocation10 + $0xa8] sm:$0xff]
    %v723 = vld [vmem:[#allocation10 + $0xb0] sm:$0xff]
    %v724 = vld [vmem:[#allocation10 + $0xb8] sm:$0xff]
    %v725 = vld [vmem:[#allocation10 + $0xc0] sm:$0xff]
    %v726 = vld [vmem:[#allocation10 + $0xc8] sm:$0xff]
    %v727 = vld [vmem:[#allocation10 + $0xd0] sm:$0xff]
    %v728 = vld [vmem:[#allocation10 + $0xd8] sm:$0xff]
    %v729 = vld [vmem:[#allocation10 + $0xe0] sm:$0xff]
    %v730 = vld [vmem:[#allocation10 + $0xe8] sm:$0xff]
    %v731 = vld [vmem:[#allocation10 + $0xf0] sm:$0xff]
    %v732 = vld [vmem:[#allocation10 + $0xf8] sm:$0xff]
    %v733 = vld [vmem:[%s6] sm:$0xf]
    %v735 = vperm.slane %v733, 0
    %v736 = vperm.slane %v733, 1
    %v737 = vperm.slane %v733, 2
    %v738 = vperm.slane %v733, 3
    %v775 = vunpack.c.l.b16 %v701
    %v776 = vunpack.c.h.b16 %v701
    %v777 = vunpack.c.l.b16 %v702
    %v778 = vunpack.c.h.b16 %v702
    %v779 = vunpack.c.l.b16 %v703
    %v780 = vunpack.c.h.b16 %v703
    %v781 = vunpack.c.l.b16 %v704
    %v782 = vunpack.c.h.b16 %v704
    %v783 = vunpack.c.l.b16 %v705
    %v784 = vunpack.c.h.b16 %v705
    %v785 = vunpack.c.l.b16 %v706
    %v786 = vunpack.c.h.b16 %v706
    %v787 = vunpack.c.l.b16 %v707
    %v788 = vunpack.c.h.b16 %v707
    %v789 = vunpack.c.l.b16 %v708
    %v790 = vunpack.c.h.b16 %v708
    %v791 = vunpack.c.l.b16 %v709
    %v792 = vunpack.c.h.b16 %v709
    %v793 = vunpack.c.l.b16 %v710
    %v794 = vunpack.c.h.b16 %v710
    %v795 = vunpack.c.l.b16 %v711
    %v796 = vunpack.c.h.b16 %v711
    %v797 = vunpack.c.l.b16 %v712
    %v798 = vunpack.c.h.b16 %v712
    %v799 = vunpack.c.l.b16 %v713
    %v800 = vunpack.c.h.b16 %v713
    %v801 = vunpack.c.l.b16 %v714
    %v802 = vunpack.c.h.b16 %v714
    %v803 = vunpack.c.l.b16 %v715
    %v804 = vunpack.c.h.b16 %v715
    %v805 = vunpack.c.l.b16 %v716
    %v806 = vunpack.c.h.b16 %v716
    %v807 = vunpack.c.l.b16 %v717
    %v808 = vunpack.c.h.b16 %v717
    %v809 = vunpack.c.l.b16 %v718
    %v810 = vunpack.c.h.b16 %v718
    %v811 = vunpack.c.l.b16 %v719
    %v812 = vunpack.c.h.b16 %v719
    %v813 = vunpack.c.l.b16 %v720
    %v814 = vunpack.c.h.b16 %v720
    %v815 = vunpack.c.l.b16 %v721
    %v816 = vunpack.c.h.b16 %v721
    %v817 = vunpack.c.l.b16 %v722
    %v818 = vunpack.c.h.b16 %v722
    %v819 = vunpack.c.l.b16 %v723
    %v820 = vunpack.c.h.b16 %v723
    %v821 = vunpack.c.l.b16 %v724
    %v822 = vunpack.c.h.b16 %v724
    %v823 = vunpack.c.l.b16 %v725
    %v824 = vunpack.c.h.b16 %v725
    %v825 = vunpack.c.l.b16 %v726
    %v826 = vunpack.c.h.b16 %v726
    %v827 = vunpack.c.l.b16 %v727
    %v828 = vunpack.c.h.b16 %v727
    %v829 = vunpack.c.l.b16 %v728
    %v830 = vunpack.c.h.b16 %v728
    %v831 = vunpack.c.l.b16 %v729
    %v832 = vunpack.c.h.b16 %v729
    %v833 = vunpack.c.l.b16 %v730
    %v834 = vunpack.c.h.b16 %v730
    %v835 = vunpack.c.l.b16 %v731
    %v836 = vunpack.c.h.b16 %v731
    %v837 = vunpack.c.l.b16 %v732
    %v838 = vunpack.c.h.b16 %v732
    %v839 = vpack.c.b16 %v779, %v775
    %v840 = vpack.c.b16 %v780, %v776
    %v841 = vpack.c.b16 %v781, %v777
    %v842 = vpack.c.b16 %v782, %v778
    %v843 = vpack.c.b16 %v787, %v783
    %v844 = vpack.c.b16 %v788, %v784
    %v845 = vpack.c.b16 %v789, %v785
    %v846 = vpack.c.b16 %v790, %v786
    %v847 = vpack.c.b16 %v795, %v791
    %v848 = vpack.c.b16 %v796, %v792
    %v849 = vpack.c.b16 %v797, %v793
    %v850 = vpack.c.b16 %v798, %v794
    %v851 = vpack.c.b16 %v803, %v799
    %v852 = vpack.c.b16 %v804, %v800
    %v853 = vpack.c.b16 %v805, %v801
    %v854 = vpack.c.b16 %v806, %v802
    %v855 = vpack.c.b16 %v811, %v807
    %v856 = vpack.c.b16 %v812, %v808
    %v857 = vpack.c.b16 %v813, %v809
    %v858 = vpack.c.b16 %v814, %v810
    %v859 = vpack.c.b16 %v819, %v815
    %v860 = vpack.c.b16 %v820, %v816
    %v861 = vpack.c.b16 %v821, %v817
    %v862 = vpack.c.b16 %v822, %v818
    %v863 = vpack.c.b16 %v827, %v823
    %v864 = vpack.c.b16 %v828, %v824
    %v865 = vpack.c.b16 %v829, %v825
    %v866 = vpack.c.b16 %v830, %v826
    %v867 = vpack.c.b16 %v835, %v831
    %v868 = vpack.c.b16 %v836, %v832
    %v869 = vpack.c.b16 %v837, %v833
    %v870 = vpack.c.b16 %v838, %v834
    %903 = vmatpush.bf16.msra.mxu0 %v867
    %904 = vmatpush.bf16.msra.mxu0 %v863
    %905 = vmatpush.bf16.msra.mxu0 %v859
    %906 = vmatpush.bf16.msra.mxu0 %v855
    %907 = vmatpush.bf16.msra.mxu0 %v851
    %908 = vmatpush.bf16.msra.mxu0 %v847
    %909 = vmatpush.bf16.msra.mxu0 %v843
    %910 = vmatpush.bf16.msra.mxu0 %v839
    %911 = vmatmul.bf16.gmra.mxu0 %v700
    %v912 = vpop.f32.mrf.mxu0
    %v913 = vadd.f32 %v735, %v912
    %v914 = vpop.f32.mrf.mxu0
    %915 = vdwg.mxu0
    %916 = vmatpush.bf16.msra.mxu0 %v868
    %917 = vmatpush.bf16.msra.mxu0 %v864
    %918 = vmatpush.bf16.msra.mxu0 %v860
    %919 = vmatpush.bf16.msra.mxu0 %v856
    %920 = vmatpush.bf16.msra.mxu0 %v852
    %921 = vmatpush.bf16.msra.mxu0 %v848
    %922 = vmatpush.bf16.msra.mxu0 %v844
    %923 = vmatpush.bf16.msra.mxu0 %v840
    %924 = vmatmul.bf16.gmra.mxu0 %v700
    %v925 = vpop.f32.mrf.mxu0
    %v926 = vadd.f32 %v736, %v925
    %v927 = vpop.f32.mrf.mxu0
    %928 = vdwg.mxu0
    %929 = vmatpush.bf16.msra.mxu0 %v869
    %930 = vmatpush.bf16.msra.mxu0 %v865
    %931 = vmatpush.bf16.msra.mxu0 %v861
    %932 = vmatpush.bf16.msra.mxu0 %v857
    %933 = vmatpush.bf16.msra.mxu0 %v853
    %934 = vmatpush.bf16.msra.mxu0 %v849
    %935 = vmatpush.bf16.msra.mxu0 %v845
    %936 = vmatpush.bf16.msra.mxu0 %v841
    %937 = vmatmul.bf16.gmra.mxu0 %v700
    %v938 = vpop.f32.mrf.mxu0
    %v939 = vadd.f32 %v737, %v938
    %v940 = vpop.f32.mrf.mxu0
    %941 = vdwg.mxu0
    %942 = vmatpush.bf16.msra.mxu0 %v870
    %943 = vmatpush.bf16.msra.mxu0 %v866
    %944 = vmatpush.bf16.msra.mxu0 %v862
    %945 = vmatpush.bf16.msra.mxu0 %v858
    %946 = vmatpush.bf16.msra.mxu0 %v854
    %947 = vmatpush.bf16.msra.mxu0 %v850
    %948 = vmatpush.bf16.msra.mxu0 %v846
    %949 = vmatpush.bf16.msra.mxu0 %v842
    %950 = vmatmul.bf16.gmra.mxu0 %v700
    %v951 = vpop.f32.mrf.mxu0
    %v952 = vadd.f32 %v738, %v951
    %v953 = vpop.f32.mrf.mxu0
    %954 = vdwg.mxu0
    %v955 = vmax.f32 %v913, 0.0
    %v956 = vmax.f32 %v926, 0.0
    %v957 = vmax.f32 %v939, 0.0
    %v958 = vmax.f32 %v952, 0.0
    %v959 = vpack.c.bf16 %v955, %v955
    %v960 = vpack.c.bf16 %v956, %v956
    %v961 = vpack.c.bf16 %v957, %v957
    %v962 = vpack.c.bf16 %v958, %v958
    %v963 = vld [vmem:[#allocation11] sm:$0xf]
    %v964 = vld [vmem:[#allocation11 + $0x4] sm:$0xf]
    %v965 = vld [vmem:[#allocation11 + $0x8] sm:$0xf]
    %v966 = vld [vmem:[#allocation11 + $0xc] sm:$0xf]
    %v967 = vld [vmem:[#allocation11 + $0x10] sm:$0xf]
    %v968 = vld [vmem:[#allocation11 + $0x14] sm:$0xf]
    %v969 = vld [vmem:[#allocation11 + $0x18] sm:$0xf]
    %v970 = vld [vmem:[#allocation11 + $0x1c] sm:$0xf]
    %v971 = vld [vmem:[#allocation11 + $0x20] sm:$0xf]
    %v972 = vld [vmem:[#allocation11 + $0x24] sm:$0xf]
    %v973 = vld [vmem:[#allocation11 + $0x28] sm:$0xf]
    %v974 = vld [vmem:[#allocation11 + $0x2c] sm:$0xf]
    %v975 = vld [vmem:[#allocation11 + $0x30] sm:$0xf]
    %v976 = vld [vmem:[#allocation11 + $0x34] sm:$0xf]
    %v977 = vld [vmem:[#allocation11 + $0x38] sm:$0xf]
    %v978 = vld [vmem:[#allocation11 + $0x3c] sm:$0xf]
    %v979 = vld [vmem:[#allocation11 + $0x40] sm:$0xf]
    %v980 = vld [vmem:[#allocation11 + $0x44] sm:$0xf]
    %v981 = vld [vmem:[#allocation11 + $0x48] sm:$0xf]
    %v982 = vld [vmem:[#allocation11 + $0x4c] sm:$0xf]
    %v983 = vld [vmem:[#allocation11 + $0x50] sm:$0xf]
    %v984 = vld [vmem:[#allocation11 + $0x54] sm:$0xf]
    %v985 = vld [vmem:[#allocation11 + $0x58] sm:$0xf]
    %v986 = vld [vmem:[#allocation11 + $0x5c] sm:$0xf]
    %v987 = vld [vmem:[#allocation11 + $0x60] sm:$0xf]
    %v988 = vld [vmem:[#allocation11 + $0x64] sm:$0xf]
    %v989 = vld [vmem:[#allocation11 + $0x68] sm:$0xf]
    %v990 = vld [vmem:[#allocation11 + $0x6c] sm:$0xf]
    %v991 = vld [vmem:[#allocation11 + $0x70] sm:$0xf]
    %v992 = vld [vmem:[#allocation11 + $0x74] sm:$0xf]
    %v993 = vld [vmem:[#allocation11 + $0x78] sm:$0xf]
    %v994 = vld [vmem:[#allocation11 + $0x7c] sm:$0xf]
    %v995 = vld [vmem:[#allocation11 + $0x80] sm:$0xf]
    %v996 = vld [vmem:[#allocation11 + $0x84] sm:$0xf]
    %v997 = vld [vmem:[#allocation11 + $0x88] sm:$0xf]
    %v998 = vld [vmem:[#allocation11 + $0x8c] sm:$0xf]
    %v999 = vld [vmem:[#allocation11 + $0x90] sm:$0xf]
    %v1000 = vld [vmem:[#allocation11 + $0x94] sm:$0xf]
    %v1001 = vld [vmem:[#allocation11 + $0x98] sm:$0xf]
    %v1002 = vld [vmem:[#allocation11 + $0x9c] sm:$0xf]
    %v1003 = vld [vmem:[#allocation11 + $0xa0] sm:$0xf]
    %v1004 = vld [vmem:[#allocation11 + $0xa4] sm:$0xf]
    %v1005 = vld [vmem:[#allocation11 + $0xa8] sm:$0xf]
    %v1006 = vld [vmem:[#allocation11 + $0xac] sm:$0xf]
    %v1007 = vld [vmem:[#allocation11 + $0xb0] sm:$0xf]
    %v1008 = vld [vmem:[#allocation11 + $0xb4] sm:$0xf]
    %v1009 = vld [vmem:[#allocation11 + $0xb8] sm:$0xf]
    %v1010 = vld [vmem:[#allocation11 + $0xbc] sm:$0xf]
    %v1011 = vld [vmem:[#allocation11 + $0xc0] sm:$0xf]
    %v1012 = vld [vmem:[#allocation11 + $0xc4] sm:$0xf]
    %v1013 = vld [vmem:[#allocation11 + $0xc8] sm:$0xf]
    %v1014 = vld [vmem:[#allocation11 + $0xcc] sm:$0xf]
    %v1015 = vld [vmem:[#allocation11 + $0xd0] sm:$0xf]
    %v1016 = vld [vmem:[#allocation11 + $0xd4] sm:$0xf]
    %v1017 = vld [vmem:[#allocation11 + $0xd8] sm:$0xf]
    %v1018 = vld [vmem:[#allocation11 + $0xdc] sm:$0xf]
    %v1019 = vld [vmem:[#allocation11 + $0xe0] sm:$0xf]
    %v1020 = vld [vmem:[#allocation11 + $0xe4] sm:$0xf]
    %v1021 = vld [vmem:[#allocation11 + $0xe8] sm:$0xf]
    %v1022 = vld [vmem:[#allocation11 + $0xec] sm:$0xf]
    %v1023 = vld [vmem:[#allocation11 + $0xf0] sm:$0xf]
    %v1024 = vld [vmem:[#allocation11 + $0xf4] sm:$0xf]
    %v1025 = vld [vmem:[#allocation11 + $0xf8] sm:$0xf]
    %v1026 = vld [vmem:[#allocation11 + $0xfc] sm:$0xf]
    %v1027 = vld [vmem:[%s8] sm:$0x1]
    %v1029 = vperm.slane %v1027, 0
    %v1095 = vunpack.c.l.b16 %v963
    %v1096 = vunpack.c.l.b16 %v964
    %v1097 = vunpack.c.l.b16 %v965
    %v1098 = vunpack.c.l.b16 %v966
    %v1099 = vunpack.c.l.b16 %v967
    %v1100 = vunpack.c.l.b16 %v968
    %v1101 = vunpack.c.l.b16 %v969
    %v1102 = vunpack.c.l.b16 %v970
    %v1103 = vunpack.c.l.b16 %v971
    %v1104 = vunpack.c.l.b16 %v972
    %v1105 = vunpack.c.l.b16 %v973
    %v1106 = vunpack.c.l.b16 %v974
    %v1107 = vunpack.c.l.b16 %v975
    %v1108 = vunpack.c.l.b16 %v976
    %v1109 = vunpack.c.l.b16 %v977
    %v1110 = vunpack.c.l.b16 %v978
    %v1111 = vunpack.c.l.b16 %v979
    %v1112 = vunpack.c.l.b16 %v980
    %v1113 = vunpack.c.l.b16 %v981
    %v1114 = vunpack.c.l.b16 %v982
    %v1115 = vunpack.c.l.b16 %v983
    %v1116 = vunpack.c.l.b16 %v984
    %v1117 = vunpack.c.l.b16 %v985
    %v1118 = vunpack.c.l.b16 %v986
    %v1119 = vunpack.c.l.b16 %v987
    %v1120 = vunpack.c.l.b16 %v988
    %v1121 = vunpack.c.l.b16 %v989
    %v1122 = vunpack.c.l.b16 %v990
    %v1123 = vunpack.c.l.b16 %v991
    %v1124 = vunpack.c.l.b16 %v992
    %v1125 = vunpack.c.l.b16 %v993
    %v1126 = vunpack.c.l.b16 %v994
    %v1127 = vunpack.c.l.b16 %v995
    %v1128 = vunpack.c.l.b16 %v996
    %v1129 = vunpack.c.l.b16 %v997
    %v1130 = vunpack.c.l.b16 %v998
    %v1131 = vunpack.c.l.b16 %v999
    %v1132 = vunpack.c.l.b16 %v1000
    %v1133 = vunpack.c.l.b16 %v1001
    %v1134 = vunpack.c.l.b16 %v1002
    %v1135 = vunpack.c.l.b16 %v1003
    %v1136 = vunpack.c.l.b16 %v1004
    %v1137 = vunpack.c.l.b16 %v1005
    %v1138 = vunpack.c.l.b16 %v1006
    %v1139 = vunpack.c.l.b16 %v1007
    %v1140 = vunpack.c.l.b16 %v1008
    %v1141 = vunpack.c.l.b16 %v1009
    %v1142 = vunpack.c.l.b16 %v1010
    %v1143 = vunpack.c.l.b16 %v1011
    %v1144 = vunpack.c.l.b16 %v1012
    %v1145 = vunpack.c.l.b16 %v1013
    %v1146 = vunpack.c.l.b16 %v1014
    %v1147 = vunpack.c.l.b16 %v1015
    %v1148 = vunpack.c.l.b16 %v1016
    %v1149 = vunpack.c.l.b16 %v1017
    %v1150 = vunpack.c.l.b16 %v1018
    %v1151 = vunpack.c.l.b16 %v1019
    %v1152 = vunpack.c.l.b16 %v1020
    %v1153 = vunpack.c.l.b16 %v1021
    %v1154 = vunpack.c.l.b16 %v1022
    %v1155 = vunpack.c.l.b16 %v1023
    %v1156 = vunpack.c.l.b16 %v1024
    %v1157 = vunpack.c.l.b16 %v1025
    %v1158 = vunpack.c.l.b16 %v1026
    %v1159 = vpack.c.b16 %v1096, %v1095
    %v1160 = vpack.c.b16 %v1098, %v1097
    %v1161 = vpack.c.b16 %v1100, %v1099
    %v1162 = vpack.c.b16 %v1102, %v1101
    %v1163 = vpack.c.b16 %v1104, %v1103
    %v1164 = vpack.c.b16 %v1106, %v1105
    %v1165 = vpack.c.b16 %v1108, %v1107
    %v1166 = vpack.c.b16 %v1110, %v1109
    %v1167 = vpack.c.b16 %v1112, %v1111
    %v1168 = vpack.c.b16 %v1114, %v1113
    %v1169 = vpack.c.b16 %v1116, %v1115
    %v1170 = vpack.c.b16 %v1118, %v1117
    %v1171 = vpack.c.b16 %v1120, %v1119
    %v1172 = vpack.c.b16 %v1122, %v1121
    %v1173 = vpack.c.b16 %v1124, %v1123
    %v1174 = vpack.c.b16 %v1126, %v1125
    %v1175 = vpack.c.b16 %v1128, %v1127
    %v1176 = vpack.c.b16 %v1130, %v1129
    %v1177 = vpack.c.b16 %v1132, %v1131
    %v1178 = vpack.c.b16 %v1134, %v1133
    %v1179 = vpack.c.b16 %v1136, %v1135
    %v1180 = vpack.c.b16 %v1138, %v1137
    %v1181 = vpack.c.b16 %v1140, %v1139
    %v1182 = vpack.c.b16 %v1142, %v1141
    %v1183 = vpack.c.b16 %v1144, %v1143
    %v1184 = vpack.c.b16 %v1146, %v1145
    %v1185 = vpack.c.b16 %v1148, %v1147
    %v1186 = vpack.c.b16 %v1150, %v1149
    %v1187 = vpack.c.b16 %v1152, %v1151
    %v1188 = vpack.c.b16 %v1154, %v1153
    %v1189 = vpack.c.b16 %v1156, %v1155
    %v1190 = vpack.c.b16 %v1158, %v1157
    %1223 = vmatpush.bf16.msra.mxu0 %v1166
    %1224 = vmatpush.bf16.msra.mxu0 %v1165
    %1225 = vmatpush.bf16.msra.mxu0 %v1164
    %1226 = vmatpush.bf16.msra.mxu0 %v1163
    %1227 = vmatpush.bf16.msra.mxu0 %v1162
    %1228 = vmatpush.bf16.msra.mxu0 %v1161
    %1229 = vmatpush.bf16.msra.mxu0 %v1160
    %1230 = vmatpush.bf16.msra.mxu0 %v1159
    %1231 = vmatmul.bf16.gmra.mxu0 %v959
    %v1232 = vpop.f32.mrf.mxu0
    %v1233 = vadd.f32 %v1029, %v1232
    %v1234 = vpop.f32.mrf.mxu0
    %1235 = vdwg.mxu0
    %1236 = vmatpush.bf16.msra.mxu0 %v1174
    %1237 = vmatpush.bf16.msra.mxu0 %v1173
    %1238 = vmatpush.bf16.msra.mxu0 %v1172
    %1239 = vmatpush.bf16.msra.mxu0 %v1171
    %1240 = vmatpush.bf16.msra.mxu0 %v1170
    %1241 = vmatpush.bf16.msra.mxu0 %v1169
    %1242 = vmatpush.bf16.msra.mxu0 %v1168
    %1243 = vmatpush.bf16.msra.mxu0 %v1167
    %1244 = vmatmul.bf16.gmra.mxu0 %v960
    %v1245 = vpop.f32.mrf.mxu0
    %v1246 = vadd.f32 %v1233, %v1245
    %v1247 = vpop.f32.mrf.mxu0
    %1248 = vdwg.mxu0
    %1249 = vmatpush.bf16.msra.mxu0 %v1182
    %1250 = vmatpush.bf16.msra.mxu0 %v1181
    %1251 = vmatpush.bf16.msra.mxu0 %v1180
    %1252 = vmatpush.bf16.msra.mxu0 %v1179
    %1253 = vmatpush.bf16.msra.mxu0 %v1178
    %1254 = vmatpush.bf16.msra.mxu0 %v1177
    %1255 = vmatpush.bf16.msra.mxu0 %v1176
    %1256 = vmatpush.bf16.msra.mxu0 %v1175
    %1257 = vmatmul.bf16.gmra.mxu0 %v961
    %v1258 = vpop.f32.mrf.mxu0
    %v1259 = vadd.f32 %v1246, %v1258
    %v1260 = vpop.f32.mrf.mxu0
    %1261 = vdwg.mxu0
    %1262 = vmatpush.bf16.msra.mxu0 %v1190
    %1263 = vmatpush.bf16.msra.mxu0 %v1189
    %1264 = vmatpush.bf16.msra.mxu0 %v1188
    %1265 = vmatpush.bf16.msra.mxu0 %v1187
    %1266 = vmatpush.bf16.msra.mxu0 %v1186
    %1267 = vmatpush.bf16.msra.mxu0 %v1185
    %1268 = vmatpush.bf16.msra.mxu0 %v1184
    %1269 = vmatpush.bf16.msra.mxu0 %v1183
    %1270 = vmatmul.bf16.gmra.mxu0 %v962
    %v1271 = vpop.f32.mrf.mxu0
    %v1272 = vadd.f32 %v1259, %v1271
    %v1273 = vpop.f32.mrf.mxu0
    %1274 = vdwg.mxu0
    %1275 = vst [vmem:[#allocation13] sm:$0xff] %v1272
    // Predicated region
    $region62: #{tpu_custom_call.1} parent=1 // pred_check
      _
    $region63: #{tpu_custom_call.1} parent=1 // pred_check_branch
      %1277 = sbr.rel (0) target = $region65
    $region64: #{tpu_custom_call.1} parent=1 // pred_region
      %1279 = vsyncadd [#allocation4], 0
      %s1281 = sshll.u32 [#allocation13], 4
      %s1282 = int_to_ptr.vmem [resolvable:$true] %s1281
      %s1283 = sshll.u32 %s9, 4
      %s1284 = int_to_ptr.hbm [resolvable:$true] %s1283
      %1286 = dma.vmem_to_hbm [thread:$0]  %s1282, 128, %s1284, [#allocation4]
    $region65: #{tpu_custom_call.1} parent=1 // pred_fallthru
      _
    // Predicated region
    $region66: #{tpu_custom_call.1} parent=1 // pred_check
      _
    $region67: #{tpu_custom_call.1} parent=1 // pred_check_branch
      %1288 = sbr.rel (0) target = $region69
    $region68: #{tpu_custom_call.1} parent=1 // pred_region
      %1290 = dma.done [#allocation4], 128
    $region69: #{tpu_custom_call.1} parent=1 // pred_fallthru
      _
    %1291 = vsyncpa [#allocation3], 1
    %1292 = vsyncpa [#allocation6], 1
    %1293 = vsyncpa [#allocation9], 1
    %1294 = vsyncpa [#allocation12], 1
    %1295 = vsyncpa [#allocation4], 1

</llo_original>
